<compile_context>
chip_gen: v7x
topology: tpu7x:2x2x1
jax: 0.10.0
libtpu: 0.0.40
codegen_flags: <defaults>
</compile_context>

<pallas_src>
import functools

import jax
import jax.numpy as jnp
import numpy as np
from jax import lax
from jax.experimental import pallas as pl
from jax.experimental.pallas import tpu as pltpu

LANE = 128
EPS = 1e-8  # torch.nn.CosineSimilarity default eps (per-norm clamp)


def _round_up(x, m):
    return ((x + m - 1) // m) * m


def _pick_row_tile(B, max_tile=256):
    """Largest row tile (multiple of 8 sublanes) dividing B, capped at max_tile.

    If B <= max_tile (or nothing divides), a single full-B tile is used; a block
    dim equal to the full array dim is always legal regardless of (8,128).
    """
    if B <= max_tile:
        return B
    for t in range(max_tile, 7, -8):
        if B % t == 0:
            return t
    return B


def _vmem_limit(step_bytes):
    # double-buffered pipeline + Mosaic internal scratch headroom, capped for v7x
    return int(min(48 << 20, max(16 << 20, 2 * step_bytes + (8 << 20))))


def _cluster_kernel(dp_ref, cent_ref, cos_ref, idx_ref, dpc_ref, csum_ref,
                    dnum_ref, *, K):
    """Per row-tile: cosine, argmax cluster, gathered centroid, update partials."""
    dp = dp_ref[...].astype(jnp.float32)        # [tB, D]
    cent = cent_ref[...].astype(jnp.float32)    # [Kp, D]  (rows >= K are zero)
    tB = dp.shape[0]
    Kp = cent.shape[0]

    # --- cosine similarity (Similarity(temp=1)) ---
    # rsqrt -> EUP; centroid norm folded into the MXU operand (no [1,K] transpose,
    # no second [tB,Kp] broadcast multiply).
    inv_dp = lax.rsqrt(jnp.maximum(jnp.sum(dp * dp, axis=-1, keepdims=True),
                                   EPS * EPS))                                  # [tB,1]
    inv_ce = lax.rsqrt(jnp.maximum(jnp.sum(cent * cent, axis=-1, keepdims=True),
                                   EPS * EPS))                                  # [Kp,1]
    cent_n = cent * inv_ce
    cos = lax.dot_general(dp, cent_n, (((1,), (1,)), ((), ())),
                          preferred_element_type=jnp.float32) * inv_dp          # [tB,Kp]
    cos_ref[...] = cos            # full-width lane-dense store; pad cols are 0

    # --- argmax over real clusters (first occurrence), pad columns masked ---
    col = lax.broadcasted_iota(jnp.int32, (tB, Kp), 1)
    cos_m = jnp.where(col < K, cos, -1e30)
    is_max = cos_m >= jnp.max(cos_m, axis=-1, keepdims=True)
    dp_index = jnp.min(jnp.where(is_max, col, Kp), axis=-1, keepdims=True)      # [tB,1]
    idx_ref[...] = dp_index
    onehot = (col == dp_index).astype(jnp.float32)                              # [tB,Kp]

    # --- gather centroid per datapoint (torch.gather) via one-hot matmul ---
    dpc_ref[...] = jnp.dot(onehot, cent, preferred_element_type=jnp.float32)    # [tB,D]

    # --- per-tile partials for update(): contract dim 0 directly on the MXU ---
    csum_ref[0] = lax.dot_general(onehot, dp, (((0,), (0,)), ((), ())),
                                  preferred_element_type=jnp.float32)           # [Kp,D]
    ones = jnp.ones((tB, 1), jnp.float32)
    dnum_ref[0] = lax.dot_general(ones, onehot, (((0,), (0,)), ((), ())),
                                  preferred_element_type=jnp.float32)           # [1,Kp]


def _adjacency_kernel(ridx_ref, cidx_ref, adj_ref, *, tile_B):
    """Same-cluster adjacency with zeroed diagonal, pure VPU index compares."""
    row0 = pl.program_id(0) * tile_B
    ridx = ridx_ref[...]          # [tB, 1]  int32
    cidx = cidx_ref[...]          # [1, Bp]  int32, pad lanes filled with -1
    tB = ridx.shape[0]
    Bp = cidx.shape[1]
    ri = row0 + lax.broadcasted_iota(jnp.int32, (tB, Bp), 0)
    ci = lax.broadcasted_iota(jnp.int32, (tB, Bp), 1)
    adj_ref[...] = ((ridx == cidx) & (ri != ci)).astype(jnp.float32)


def kmeans_cluster_forward(datapoints, centroid, non_zero, *, max_row_tile=256):
    B, D = datapoints.shape
    K = centroid.shape[0]
    Kp = _round_up(K, LANE)
    Bp = _round_up(B, LANE)
    tB = _pick_row_tile(B, max_row_tile)
    nt = B // tB

    cent_p = jnp.pad(centroid.astype(jnp.float32), ((0, Kp - K), (0, 0)))

    f32 = 4
    step1 = f32 * (tB * D + Kp * D            # inputs: dp tile, padded centroid
                   + tB * Kp + tB + tB * D    # outputs: cos, idx, dpc
                   + Kp * D + Kp)             # outputs: csum/dnum partials
    cos_p, dp_index, dpc, csum_p, dnum_p = pl.pallas_call(
        functools.partial(_cluster_kernel, K=K),
        grid=(nt,),
        in_specs=[pl.BlockSpec((tB, D), lambda i: (i, 0)),
                  pl.BlockSpec((Kp, D), lambda i: (0, 0))],
        out_specs=(pl.BlockSpec((tB, Kp), lambda i: (i, 0)),
                   pl.BlockSpec((tB, 1), lambda i: (i, 0)),
                   pl.BlockSpec((tB, D), lambda i: (i, 0)),
                   pl.BlockSpec((1, Kp, D), lambda i: (i, 0, 0)),
                   pl.BlockSpec((1, 1, Kp), lambda i: (i, 0, 0))),
        out_shape=(jax.ShapeDtypeStruct((B, Kp), jnp.float32),
                   jax.ShapeDtypeStruct((B, 1), jnp.int32),
                   jax.ShapeDtypeStruct((B, D), jnp.float32),
                   jax.ShapeDtypeStruct((nt, Kp, D), jnp.float32),
                   jax.ShapeDtypeStruct((nt, 1, Kp), jnp.float32)),
        compiler_params=pltpu.CompilerParams(
            dimension_semantics=("parallel",),
            vmem_limit_bytes=_vmem_limit(step1)),
    )(datapoints, cent_p)

    # Column cluster indices for the adjacency kernel: [1, Bp], pad = -1 so padded
    # lanes never match (adjacency pad columns come out 0 without extra masking).
    idx_cols = jnp.pad(dp_index[:, 0], (0, Bp - B), constant_values=-1)[None, :]

    step2 = f32 * (tB + Bp + tB * Bp)
    adj_p = pl.pallas_call(
        functools.partial(_adjacency_kernel, tile_B=tB),
        grid=(nt,),
        in_specs=[pl.BlockSpec((tB, 1), lambda i: (i, 0)),
                  pl.BlockSpec((1, Bp), lambda i: (0, 0))],
        out_specs=pl.BlockSpec((tB, Bp), lambda i: (i, 0)),
        out_shape=jax.ShapeDtypeStruct((B, Bp), jnp.float32),
        compiler_params=pltpu.CompilerParams(
            dimension_semantics=("parallel",),
            vmem_limit_bytes=_vmem_limit(step2)),
    )(dp_index, idx_cols)

    # update(): tiny [K, D] combine of the per-tile partials in the wrapper.
    # (data * data_num) == cluster_sum exactly (both 0 for empty clusters), so the
    # torch clamp(1e-10)/divide/re-multiply folds away; nz >= 1 is enforced upstream.
    nz = non_zero.astype(jnp.float32)
    cluster_sum = jnp.sum(csum_p, axis=0)[:K]                    # [K, D]
    data_num = jnp.sum(dnum_p, axis=0)[0, :K][:, None]           # [K, 1]
    new_centroid = (cluster_sum + centroid.astype(jnp.float32) * nz) / (data_num + nz)

    # Slice the lane padding off in the wrapper (cheap XLA slice).
    return cos_p[:, :K], adj_p[:, :B], dpc, new_centroid


def reference(datapoints, centroid, non_zero):
    """Plain-JAX mirror of the PyTorch forward semantics, for verification."""
    eps = 1e-8
    dp = datapoints.astype(jnp.float32)
    cent = centroid.astype(jnp.float32)
    dpn = jnp.maximum(jnp.linalg.norm(dp, axis=-1, keepdims=True), eps)
    cen = jnp.maximum(jnp.linalg.norm(cent, axis=-1, keepdims=True), eps)
    cos = (dp @ cent.T) / (dpn * cen.T)
    idx = jnp.argmax(cos, axis=-1)
    onehot = jax.nn.one_hot(idx, cent.shape[0], dtype=jnp.float32)
    adj = (onehot @ onehot.T) * (1.0 - jnp.eye(dp.shape[0], dtype=jnp.float32))
    dp_centroid = cent[idx]
    data_num = jnp.sum(onehot, axis=0)[:, None]
    data = (onehot.T @ dp) / jnp.maximum(data_num, 1e-10)
    denom = data_num + non_zero
    new_cent = (data * data_num + cent * non_zero) / denom
    return cos, adj, dp_centroid, new_cent


if __name__ == "__main__":
    # Small synthetic shapes consistent with the module (bsz x hidden, k centroids).
    B, D, K = 8, 256, 8

    key = jax.random.PRNGKey(0)
    k1, k2 = jax.random.split(key)
    datapoints = jax.random.normal(k1, (B, D), dtype=jnp.float32)   # sentence embeddings
    centroid = jax.random.normal(k2, (K, D), dtype=jnp.float32)     # self.centroid (Parameter)

    # Memory bank exactly as in __init__: k queues of zeros, fp16 (bankfull=False path).
    clusters_sample = [jnp.zeros((64, D), dtype=jnp.float16) for _ in range(K)]
    sums = [jnp.sum(q, axis=1) for q in clusters_sample]
    non_zero = jnp.stack(
        [jnp.maximum(jnp.count_nonzero(s), 1) for s in sums]
    ).astype(jnp.float32)[:, None]                                   # [K,1]

    # batch_cos_sim is only used in the kmean_debug branch (TensorBoard logging) -> skipped.
    # TODO(synk): debug_stat / SummaryWriter logging has no Pallas equivalent (host-side I/O).

    outs = kmeans_cluster_forward(datapoints, centroid, non_zero)
    outs = jax.block_until_ready(outs)

    refs = reference(datapoints, centroid, non_zero)
    for o, r in zip(outs, refs):
        np.testing.assert_allclose(np.asarray(o), np.asarray(r), rtol=1e-4, atol=1e-5)

    print("KERNEL_OK")
</pallas_src>

<mosaic_0001>
module attributes {stable_mosaic.version = 11 : i64} {
  func.func @_cluster_kernel(%arg0: i32, %arg1: memref<8x256xf32, #tpu.memory_space<vmem>>, %arg2: memref<128x256xf32, #tpu.memory_space<vmem>>, %arg3: memref<8x128xf32, #tpu.memory_space<vmem>>, %arg4: memref<8x1xi32, #tpu.memory_space<vmem>>, %arg5: memref<8x256xf32, #tpu.memory_space<vmem>>, %arg6: memref<1x128x256xf32, #tpu.memory_space<vmem>>, %arg7: memref<1x1x128xf32, #tpu.memory_space<vmem>>) attributes {dimension_semantics = [#tpu.dimension_semantics<parallel>], iteration_bounds = array<i64: 1>, scalar_prefetch = 0 : i64, scratch_operands = 0 : i64, tpu.core_type = #tpu.core_type<tc>, window_params = [{transform_indices = @transform_0, window_bounds = array<i64: 8, 256>}, {pipeline_mode = #tpu.pipeline_mode<synchronous>, transform_indices = @transform_1, window_bounds = array<i64: 128, 256>}, {transform_indices = @transform_2, window_bounds = array<i64: 8, 128>}, {transform_indices = @transform_3, window_bounds = array<i64: 8, 1>}, {transform_indices = @transform_4, window_bounds = array<i64: 8, 256>}, {transform_indices = @transform_5, window_bounds = array<i64: 1, 128, 256>}, {transform_indices = @transform_6, window_bounds = array<i64: 1, 1, 128>}]} {
    %c0 = arith.constant 0 : index
    %c0_0 = arith.constant 0 : index
    %0 = vector.load %arg1[%c0, %c0_0] : memref<8x256xf32, #tpu.memory_space<vmem>>, vector<8x256xf32>
    %c0_1 = arith.constant 0 : index
    %c0_2 = arith.constant 0 : index
    %1 = vector.load %arg2[%c0_1, %c0_2] : memref<128x256xf32, #tpu.memory_space<vmem>>, vector<128x256xf32>
    %2 = arith.mulf %0, %0 : vector<8x256xf32>
    %cst = arith.constant dense<0.000000e+00> : vector<8xf32>
    %3 = vector.multi_reduction <add>, %2, %cst [1] : vector<8x256xf32> to vector<8xf32>
    %4 = vector.shape_cast %3 : vector<8xf32> to vector<8x1xf32>
    %cst_3 = arith.constant 1.000000e-16 : f32
    %5 = vector.broadcast %cst_3 : f32 to vector<8x1xf32>
    %6 = arith.maximumf %4, %5 : vector<8x1xf32>
    %7 = math.rsqrt %6 : vector<8x1xf32>
    %8 = arith.mulf %1, %1 : vector<128x256xf32>
    %cst_4 = arith.constant dense<0.000000e+00> : vector<128xf32>
    %9 = vector.multi_reduction <add>, %8, %cst_4 [1] : vector<128x256xf32> to vector<128xf32>
    %10 = vector.shape_cast %9 : vector<128xf32> to vector<128x1xf32>
    %cst_5 = arith.constant 1.000000e-16 : f32
    %11 = vector.broadcast %cst_5 : f32 to vector<128x1xf32>
    %12 = arith.maximumf %10, %11 : vector<128x1xf32>
    %13 = math.rsqrt %12 : vector<128x1xf32>
    %14 = vector.broadcast %13 : vector<128x1xf32> to vector<128x256xf32>
    %15 = arith.mulf %1, %14 : vector<128x256xf32>
    %cst_6 = arith.constant dense<0.000000e+00> : vector<8x128xf32>
    %16 = tpu.matmul %0, %15, %cst_6 {dimension_numbers = #tpu.dot_dimension_numbers<[1], [1], [0], [0], [0, 0, 1, 0], [], []>} : vector<8x256xf32>, vector<128x256xf32>, vector<8x128xf32> -> vector<8x128xf32>
    %17 = vector.broadcast %7 : vector<8x1xf32> to vector<8x128xf32>
    %18 = arith.mulf %16, %17 : vector<8x128xf32>
    %c0_7 = arith.constant 0 : index
    %c0_8 = arith.constant 0 : index
    %19 = vector.load %arg3[%c0_7, %c0_8] : memref<8x128xf32, #tpu.memory_space<vmem>>, vector<8x128xf32>
    tpu.vector_store %arg3[%c0_7, %c0_8], %18 {strides = array<i32>} : memref<8x128xf32, #tpu.memory_space<vmem>>, vector<8x128xf32>,
    %20 = tpu.iota {dimensions = array<i32: 1>} : vector<8x128xi32>
    %c8_i32 = arith.constant 8 : i32
    %21 = vector.broadcast %c8_i32 : i32 to vector<8x128xi32>
    %22 = arith.cmpi slt, %20, %21 : vector<8x128xi32>
    %cst_9 = arith.constant -1.000000e+30 : f32
    %23 = vector.broadcast %cst_9 : f32 to vector<8x128xf32>
    %24 = arith.select %22, %18, %23 : vector<8x128xi1>, vector<8x128xf32>
    %cst_10 = arith.constant dense<0xFF800000> : vector<8xf32>
    %25 = vector.multi_reduction <maximumf>, %24, %cst_10 [1] : vector<8x128xf32> to vector<8xf32>
    %26 = vector.shape_cast %25 : vector<8xf32> to vector<8x1xf32>
    %27 = vector.broadcast %26 : vector<8x1xf32> to vector<8x128xf32>
    %28 = arith.cmpf oge, %24, %27 : vector<8x128xf32>
    %c128_i32 = arith.constant 128 : i32
    %29 = vector.broadcast %c128_i32 : i32 to vector<8x128xi32>
    %30 = arith.select %28, %20, %29 : vector<8x128xi1>, vector<8x128xi32>
    %cst_11 = arith.constant dense<2147483647> : vector<8xi32>
    %31 = vector.multi_reduction <minsi>, %30, %cst_11 [1] : vector<8x128xi32> to vector<8xi32>
    %32 = vector.shape_cast %31 : vector<8xi32> to vector<8x1xi32>
    %c0_12 = arith.constant 0 : index
    %c0_13 = arith.constant 0 : index
    %33 = vector.load %arg4[%c0_12, %c0_13] : memref<8x1xi32, #tpu.memory_space<vmem>>, vector<8x1xi32>
    tpu.vector_store %arg4[%c0_12, %c0_13], %32 {strides = array<i32>} : memref<8x1xi32, #tpu.memory_space<vmem>>, vector<8x1xi32>,
    %34 = vector.broadcast %32 : vector<8x1xi32> to vector<8x128xi32>
    %35 = arith.cmpi eq, %20, %34 : vector<8x128xi32>
    %36 = arith.extui %35 : vector<8x128xi1> to vector<8x128xi32>
    %37 = arith.sitofp %36 : vector<8x128xi32> to vector<8x128xf32>
    %cst_14 = arith.constant dense<0.000000e+00> : vector<8x256xf32>
    %38 = tpu.matmul %37, %1, %cst_14 {dimension_numbers = #tpu.dot_dimension_numbers<[1], [0], [0], [1], [0, 0, 1, 1], [], []>} : vector<8x128xf32>, vector<128x256xf32>, vector<8x256xf32> -> vector<8x256xf32>
    %c0_15 = arith.constant 0 : index
    %c0_16 = arith.constant 0 : index
    %39 = vector.load %arg5[%c0_15, %c0_16] : memref<8x256xf32, #tpu.memory_space<vmem>>, vector<8x256xf32>
    tpu.vector_store %arg5[%c0_15, %c0_16], %38 {strides = array<i32>} : memref<8x256xf32, #tpu.memory_space<vmem>>, vector<8x256xf32>,
    %cst_17 = arith.constant dense<0.000000e+00> : vector<128x256xf32>
    %40 = tpu.matmul %37, %0, %cst_17 {dimension_numbers = #tpu.dot_dimension_numbers<[0], [0], [1], [1], [0, 1, 1, 1], [], []>} : vector<8x128xf32>, vector<8x256xf32>, vector<128x256xf32> -> vector<128x256xf32>
    %c0_18 = arith.constant 0 : index
    %c0_19 = arith.constant 0 : index
    %c0_20 = arith.constant 0 : index
    %41 = vector.load %arg6[%c0_18, %c0_19, %c0_20] : memref<1x128x256xf32, #tpu.memory_space<vmem>>, vector<1x128x256xf32>
    %42 = vector.shape_cast %41 : vector<1x128x256xf32> to vector<128x256xf32>
    %43 = vector.shape_cast %40 : vector<128x256xf32> to vector<1x128x256xf32>
    tpu.vector_store %arg6[%c0_18, %c0_19, %c0_20], %43 {strides = array<i32>} : memref<1x128x256xf32, #tpu.memory_space<vmem>>, vector<1x128x256xf32>,
    %cst_21 = arith.constant 1.000000e+00 : f32
    %44 = vector.broadcast %cst_21 : f32 to vector<8x1xf32>
    %cst_22 = arith.constant dense<0.000000e+00> : vector<1x128xf32>
    %45 = tpu.matmul %44, %37, %cst_22 {dimension_numbers = #tpu.dot_dimension_numbers<[0], [0], [1], [1], [0, 1, 1, 1], [], []>} : vector<8x1xf32>, vector<8x128xf32>, vector<1x128xf32> -> vector<1x128xf32>
    %c0_23 = arith.constant 0 : index
    %c0_24 = arith.constant 0 : index
    %c0_25 = arith.constant 0 : index
    %46 = vector.load %arg7[%c0_23, %c0_24, %c0_25] : memref<1x1x128xf32, #tpu.memory_space<vmem>>, vector<1x1x128xf32>
    %47 = vector.shape_cast %46 : vector<1x1x128xf32> to vector<1x128xf32>
    %48 = vector.shape_cast %45 : vector<1x128xf32> to vector<1x1x128xf32>
    tpu.vector_store %arg7[%c0_23, %c0_24, %c0_25], %48 {strides = array<i32>} : memref<1x1x128xf32, #tpu.memory_space<vmem>>, vector<1x1x128xf32>,
    return
  }
  func.func @transform_0(%arg0: i32) -> (i32, i32) {
    %c0_i32 = arith.constant 0 : i32
    %c0_i32_0 = arith.constant 0 : i32
    return %arg0, %c0_i32 : i32, i32
  }
  func.func @transform_1(%arg0: i32) -> (i32, i32) {
    %c0_i32 = arith.constant 0 : i32
    %c0_i32_0 = arith.constant 0 : i32
    %c0_i32_1 = arith.constant 0 : i32
    return %c0_i32, %c0_i32_0 : i32, i32
  }
  func.func @transform_2(%arg0: i32) -> (i32, i32) {
    %c0_i32 = arith.constant 0 : i32
    %c0_i32_0 = arith.constant 0 : i32
    return %arg0, %c0_i32 : i32, i32
  }
  func.func @transform_3(%arg0: i32) -> (i32, i32) {
    %c0_i32 = arith.constant 0 : i32
    %c0_i32_0 = arith.constant 0 : i32
    return %arg0, %c0_i32 : i32, i32
  }
  func.func @transform_4(%arg0: i32) -> (i32, i32) {
    %c0_i32 = arith.constant 0 : i32
    %c0_i32_0 = arith.constant 0 : i32
    return %arg0, %c0_i32 : i32, i32
  }
  func.func @transform_5(%arg0: i32) -> (i32, i32, i32) {
    %c0_i32 = arith.constant 0 : i32
    %c0_i32_0 = arith.constant 0 : i32
    %c0_i32_1 = arith.constant 0 : i32
    return %arg0, %c0_i32, %c0_i32_0 : i32, i32, i32
  }
  func.func @transform_6(%arg0: i32) -> (i32, i32, i32) {
    %c0_i32 = arith.constant 0 : i32
    %c0_i32_0 = arith.constant 0 : i32
    %c0_i32_1 = arith.constant 0 : i32
    return %arg0, %c0_i32, %c0_i32_0 : i32, i32, i32
  }
}

</mosaic_0001>

<llo_original>
// kernel: tpu_custom_call.1
$region0: #{tpu_custom_call.1}
  #allocation0 [shape = 'u32[]', space=smem, size = 0x4, offset = 0x4, fixed_abs, tag = 'smem constant byte address 0x4 - core index']
  #allocation1 [shape = 'u32[144,128]{1,0:T(1,128)}', space=vmem, size = 0x12000, scoped, tag = 'internal scratch']
  %s0 = inlined_call_operand.hbm [shape: f32[8,256], index: 0, kind: input, shape index: {}]
  %s1 = inlined_call_operand.hbm [shape: f32[128,256], index: 1, kind: input, shape index: {}]
  %s2 = inlined_call_operand.hbm [shape: f32[8,128], index: 2, kind: output, shape index: {0}]
  %s3 = inlined_call_operand.vmem [shape: s32[8,1], index: 3, kind: output, shape index: {1}]
  %s4 = inlined_call_operand.hbm [shape: f32[8,256], index: 4, kind: output, shape index: {2}]
  %s5 = inlined_call_operand.hbm [shape: f32[1,128,256], index: 5, kind: output, shape index: {3}]
  %s6 = inlined_call_operand.hbm [shape: f32[1,1,128], index: 6, kind: output, shape index: {4}]
  %7 = xla_tuple %s2, %s3, %s4, %s5, %s6
  %s8 = sld [smem:[#allocation0]]
  $region58: #{tpu_custom_call.1} parent=0
    _
  %s10 = ssub.s32 1, %s8
  %s11 = scalar_select 0, %s10, %s8
  $region1: #{tpu_custom_call.1} parent=0
    #allocation2 [shape = 'u8[8192]{0}', space=vmem, size = 0x2000, scoped, tag = 'input window, operand 0, single buffered']
    #allocation3 [shape = 's32[1]{0}', space=sflag, size = 0x4, scoped, tag = 'scoped memory for tpu_custom_call.1']
    #allocation4 [shape = 's32[1]{0}', space=sflag, size = 0x4, scoped, tag = 'scoped memory for tpu_custom_call.1']
    #allocation5 [shape = 'u8[131072]{0}', space=vmem, size = 0x20000, scoped, tag = 'input window, operand 1, single buffered']
    #allocation6 [shape = 's32[1]{0}', space=sflag, size = 0x4, scoped, tag = 'scoped memory for tpu_custom_call.1']
    #allocation7 [shape = 'u8[4096]{0}', space=vmem, size = 0x1000, scoped, tag = 'output window, operand 0, single buffered']
    #allocation8 [shape = 'u8[8192]{0}', space=vmem, size = 0x2000, scoped, tag = 'output window, operand 2, single buffered']
    #allocation9 [shape = 's32[1]{0}', space=sflag, size = 0x4, scoped, tag = 'scoped memory for tpu_custom_call.1']
    #allocation10 [shape = 'u8[131072]{0}', space=vmem, size = 0x20000, scoped, tag = 'output window, operand 3, single buffered']
    #allocation11 [shape = 'u8[512]{0}', space=vmem, size = 0x400, scoped, tag = 'output window, operand 4, single buffered']
    #allocation12 [shape = 's32[1]{0}', space=sflag, size = 0x4, scoped, tag = 'scoped memory for tpu_custom_call.1']
    %12 = vsyncpa [#allocation3], 0
    %13 = vsyncpa [#allocation6], 0
    %14 = vsyncpa [#allocation4], 0
    %15 = vsyncpa [#allocation9], 0
    %16 = vsyncpa [#allocation12], 0
    // Predicated region
    $region2: #{tpu_custom_call.1} parent=1 // pred_check
      _
    $region3: #{tpu_custom_call.1} parent=1 // pred_check_branch
      %18 = sbr.rel (0) target = $region5
    $region4: #{tpu_custom_call.1} parent=1 // pred_region
      %s20 = ssub.s32 256, 256
      %21 = vsyncadd [#allocation3], %s20
      %s23 = sshll.u32 [#allocation2], 4
      %s24 = int_to_ptr.vmem [resolvable:$true] %s23
      %26 = dma.hbm_to_vmem [thread:$0]  %s0, 256, %s24, [#allocation3]
    $region5: #{tpu_custom_call.1} parent=1 // pred_fallthru
      _
    // Predicated region
    $region6: #{tpu_custom_call.1} parent=1 // pred_check
      _
    $region7: #{tpu_custom_call.1} parent=1 // pred_check_branch
      %28 = sbr.rel (0) target = $region9
    $region8: #{tpu_custom_call.1} parent=1 // pred_region
      %s30 = ssub.s32 4096, 4096
      %31 = vsyncadd [#allocation6], %s30
      %s32 = sshll.u32 [#allocation5], 4
      %s33 = int_to_ptr.vmem [resolvable:$true] %s32
      %38 = dma.hbm_to_vmem [thread:$0]  %s1, 4096, %s33, [#allocation6], 256, 256, 16
    $region9: #{tpu_custom_call.1} parent=1 // pred_fallthru
      _
    // Predicated region
    $region10: #{tpu_custom_call.1} parent=1 // pred_check
      _
    $region11: #{tpu_custom_call.1} parent=1 // pred_check_branch
      %40 = sbr.rel (0) target = $region13
    $region12: #{tpu_custom_call.1} parent=1 // pred_region
      %41 = dma.done [#allocation3], 256
    $region13: #{tpu_custom_call.1} parent=1 // pred_fallthru
      _
    // Predicated region
    $region14: #{tpu_custom_call.1} parent=1 // pred_check
      _
    $region15: #{tpu_custom_call.1} parent=1 // pred_check_branch
      %43 = sbr.rel (0) target = $region17
    $region16: #{tpu_custom_call.1} parent=1 // pred_region
      %44 = dma.done [#allocation6], 4096
    $region17: #{tpu_custom_call.1} parent=1 // pred_fallthru
      _
    %v45 = vld [vmem:[#allocation2] sm:$0xff]
    %v46 = vld [vmem:[#allocation2 + $0x8] sm:$0xff]
    %v47 = vld [vmem:[#allocation5] sm:$0xff]
    %v48 = vld [vmem:[#allocation5 + $0x8] sm:$0xff]
    %v49 = vld [vmem:[#allocation5 + $0x10] sm:$0xff]
    %v50 = vld [vmem:[#allocation5 + $0x18] sm:$0xff]
    %v51 = vld [vmem:[#allocation5 + $0x20] sm:$0xff]
    %v52 = vld [vmem:[#allocation5 + $0x28] sm:$0xff]
    %v53 = vld [vmem:[#allocation5 + $0x30] sm:$0xff]
    %v54 = vld [vmem:[#allocation5 + $0x38] sm:$0xff]
    %v55 = vld [vmem:[#allocation5 + $0x40] sm:$0xff]
    %v56 = vld [vmem:[#allocation5 + $0x48] sm:$0xff]
    %v57 = vld [vmem:[#allocation5 + $0x50] sm:$0xff]
    %v58 = vld [vmem:[#allocation5 + $0x58] sm:$0xff]
    %v59 = vld [vmem:[#allocation5 + $0x60] sm:$0xff]
    %v60 = vld [vmem:[#allocation5 + $0x68] sm:$0xff]
    %v61 = vld [vmem:[#allocation5 + $0x70] sm:$0xff]
    %v62 = vld [vmem:[#allocation5 + $0x78] sm:$0xff]
    %v63 = vld [vmem:[#allocation5 + $0x80] sm:$0xff]
    %v64 = vld [vmem:[#allocation5 + $0x88] sm:$0xff]
    %v65 = vld [vmem:[#allocation5 + $0x90] sm:$0xff]
    %v66 = vld [vmem:[#allocation5 + $0x98] sm:$0xff]
    %v67 = vld [vmem:[#allocation5 + $0xa0] sm:$0xff]
    %v68 = vld [vmem:[#allocation5 + $0xa8] sm:$0xff]
    %v69 = vld [vmem:[#allocation5 + $0xb0] sm:$0xff]
    %v70 = vld [vmem:[#allocation5 + $0xb8] sm:$0xff]
    %v71 = vld [vmem:[#allocation5 + $0xc0] sm:$0xff]
    %v72 = vld [vmem:[#allocation5 + $0xc8] sm:$0xff]
    %v73 = vld [vmem:[#allocation5 + $0xd0] sm:$0xff]
    %v74 = vld [vmem:[#allocation5 + $0xd8] sm:$0xff]
    %v75 = vld [vmem:[#allocation5 + $0xe0] sm:$0xff]
    %v76 = vld [vmem:[#allocation5 + $0xe8] sm:$0xff]
    %v77 = vld [vmem:[#allocation5 + $0xf0] sm:$0xff]
    %v78 = vld [vmem:[#allocation5 + $0xf8] sm:$0xff]
    %v79 = vmul.f32 %v45, %v45
    %v80 = vmul.f32 %v46, %v46
    %v81 = vadd.f32 %v79, %v80
    %82 = vadd.xlane.f32.xlu0 %v81
    %v83 = vpop.xlane.xlu0 %82
    %v84 = vmax.f32 %v83, 1e-16
    %v85 = vrsqrt.pop %v84
    %v86 = vmul.f32 %v47, %v47
    %v87 = vmul.f32 %v48, %v48
    %v88 = vmul.f32 %v49, %v49
    %v89 = vmul.f32 %v50, %v50
    %v90 = vmul.f32 %v51, %v51
    %v91 = vmul.f32 %v52, %v52
    %v92 = vmul.f32 %v53, %v53
    %v93 = vmul.f32 %v54, %v54
    %v94 = vmul.f32 %v55, %v55
    %v95 = vmul.f32 %v56, %v56
    %v96 = vmul.f32 %v57, %v57
    %v97 = vmul.f32 %v58, %v58
    %v98 = vmul.f32 %v59, %v59
    %v99 = vmul.f32 %v60, %v60
    %v100 = vmul.f32 %v61, %v61
    %v101 = vmul.f32 %v62, %v62
    %v102 = vmul.f32 %v63, %v63
    %v103 = vmul.f32 %v64, %v64
    %v104 = vmul.f32 %v65, %v65
    %v105 = vmul.f32 %v66, %v66
    %v106 = vmul.f32 %v67, %v67
    %v107 = vmul.f32 %v68, %v68
    %v108 = vmul.f32 %v69, %v69
    %v109 = vmul.f32 %v70, %v70
    %v110 = vmul.f32 %v71, %v71
    %v111 = vmul.f32 %v72, %v72
    %v112 = vmul.f32 %v73, %v73
    %v113 = vmul.f32 %v74, %v74
    %v114 = vmul.f32 %v75, %v75
    %v115 = vmul.f32 %v76, %v76
    %v116 = vmul.f32 %v77, %v77
    %v117 = vmul.f32 %v78, %v78
    %v118 = vadd.f32 %v86, %v87
    %119 = vadd.xlane.f32.xlu0 %v118
    %v120 = vpop.xlane.xlu0 %119
    %v121 = vadd.f32 %v88, %v89
    %122 = vadd.xlane.f32.xlu0 %v121
    %v123 = vpop.xlane.xlu0 %122
    %v124 = vadd.f32 %v90, %v91
    %125 = vadd.xlane.f32.xlu0 %v124
    %v126 = vpop.xlane.xlu0 %125
    %v127 = vadd.f32 %v92, %v93
    %128 = vadd.xlane.f32.xlu0 %v127
    %v129 = vpop.xlane.xlu0 %128
    %v130 = vadd.f32 %v94, %v95
    %131 = vadd.xlane.f32.xlu0 %v130
    %v132 = vpop.xlane.xlu0 %131
    %v133 = vadd.f32 %v96, %v97
    %134 = vadd.xlane.f32.xlu0 %v133
    %v135 = vpop.xlane.xlu0 %134
    %v136 = vadd.f32 %v98, %v99
    %137 = vadd.xlane.f32.xlu0 %v136
    %v138 = vpop.xlane.xlu0 %137
    %v139 = vadd.f32 %v100, %v101
    %140 = vadd.xlane.f32.xlu0 %v139
    %v141 = vpop.xlane.xlu0 %140
    %v142 = vadd.f32 %v102, %v103
    %143 = vadd.xlane.f32.xlu0 %v142
    %v144 = vpop.xlane.xlu0 %143
    %v145 = vadd.f32 %v104, %v105
    %146 = vadd.xlane.f32.xlu0 %v145
    %v147 = vpop.xlane.xlu0 %146
    %v148 = vadd.f32 %v106, %v107
    %149 = vadd.xlane.f32.xlu0 %v148
    %v150 = vpop.xlane.xlu0 %149
    %v151 = vadd.f32 %v108, %v109
    %152 = vadd.xlane.f32.xlu0 %v151
    %v153 = vpop.xlane.xlu0 %152
    %v154 = vadd.f32 %v110, %v111
    %155 = vadd.xlane.f32.xlu0 %v154
    %v156 = vpop.xlane.xlu0 %155
    %v157 = vadd.f32 %v112, %v113
    %158 = vadd.xlane.f32.xlu0 %v157
    %v159 = vpop.xlane.xlu0 %158
    %v160 = vadd.f32 %v114, %v115
    %161 = vadd.xlane.f32.xlu0 %v160
    %v162 = vpop.xlane.xlu0 %161
    %v163 = vadd.f32 %v116, %v117
    %164 = vadd.xlane.f32.xlu0 %v163
    %v165 = vpop.xlane.xlu0 %164
    %v166 = vmax.f32 %v120, 1e-16
    %v167 = vmax.f32 %v123, 1e-16
    %v168 = vmax.f32 %v126, 1e-16
    %v169 = vmax.f32 %v129, 1e-16
    %v170 = vmax.f32 %v132, 1e-16
    %v171 = vmax.f32 %v135, 1e-16
    %v172 = vmax.f32 %v138, 1e-16
    %v173 = vmax.f32 %v141, 1e-16
    %v174 = vmax.f32 %v144, 1e-16
    %v175 = vmax.f32 %v147, 1e-16
    %v176 = vmax.f32 %v150, 1e-16
    %v177 = vmax.f32 %v153, 1e-16
    %v178 = vmax.f32 %v156, 1e-16
    %v179 = vmax.f32 %v159, 1e-16
    %v180 = vmax.f32 %v162, 1e-16
    %v181 = vmax.f32 %v165, 1e-16
    %v182 = vrsqrt.pop %v166
    %v183 = vrsqrt.pop %v167
    %v184 = vrsqrt.pop %v168
    %v185 = vrsqrt.pop %v169
    %v186 = vrsqrt.pop %v170
    %v187 = vrsqrt.pop %v171
    %v188 = vrsqrt.pop %v172
    %v189 = vrsqrt.pop %v173
    %v190 = vrsqrt.pop %v174
    %v191 = vrsqrt.pop %v175
    %v192 = vrsqrt.pop %v176
    %v193 = vrsqrt.pop %v177
    %v194 = vrsqrt.pop %v178
    %v195 = vrsqrt.pop %v179
    %v196 = vrsqrt.pop %v180
    %v197 = vrsqrt.pop %v181
    %v198 = vmul.f32 %v47, %v182
    %v199 = vmul.f32 %v48, %v182
    %v200 = vmul.f32 %v49, %v183
    %v201 = vmul.f32 %v50, %v183
    %v202 = vmul.f32 %v51, %v184
    %v203 = vmul.f32 %v52, %v184
    %v204 = vmul.f32 %v53, %v185
    %v205 = vmul.f32 %v54, %v185
    %v206 = vmul.f32 %v55, %v186
    %v207 = vmul.f32 %v56, %v186
    %v208 = vmul.f32 %v57, %v187
    %v209 = vmul.f32 %v58, %v187
    %v210 = vmul.f32 %v59, %v188
    %v211 = vmul.f32 %v60, %v188
    %v212 = vmul.f32 %v61, %v189
    %v213 = vmul.f32 %v62, %v189
    %v214 = vmul.f32 %v63, %v190
    %v215 = vmul.f32 %v64, %v190
    %v216 = vmul.f32 %v65, %v191
    %v217 = vmul.f32 %v66, %v191
    %v218 = vmul.f32 %v67, %v192
    %v219 = vmul.f32 %v68, %v192
    %v220 = vmul.f32 %v69, %v193
    %v221 = vmul.f32 %v70, %v193
    %v222 = vmul.f32 %v71, %v194
    %v223 = vmul.f32 %v72, %v194
    %v224 = vmul.f32 %v73, %v195
    %v225 = vmul.f32 %v74, %v195
    %v226 = vmul.f32 %v75, %v196
    %v227 = vmul.f32 %v76, %v196
    %v228 = vmul.f32 %v77, %v197
    %v229 = vmul.f32 %v78, %v197
    %230 = vmatprep.subr.mxu0 %v199
    %231 = vmatpush1.xpose.msra.mxu0 %v198
    %232 = vmatprep.subr.mxu0 %v201
    %233 = vmatpush1.xpose.msra.mxu0 %v200
    %234 = vmatprep.subr.mxu0 %v203
    %235 = vmatpush1.xpose.msra.mxu0 %v202
    %236 = vmatprep.subr.mxu0 %v205
    %237 = vmatpush1.xpose.msra.mxu0 %v204
    %238 = vmatprep.subr.mxu0 %v207
    %239 = vmatpush1.xpose.msra.mxu0 %v206
    %240 = vmatprep.subr.mxu0 %v209
    %241 = vmatpush1.xpose.msra.mxu0 %v208
    %242 = vmatprep.subr.mxu0 %v211
    %243 = vmatpush1.xpose.msra.mxu0 %v210
    %244 = vmatprep.subr.mxu0 %v213
    %245 = vmatpush1.xpose.msra.mxu0 %v212
    %246 = vmatprep.subr.mxu0 %v215
    %247 = vmatpush1.xpose.msra.mxu0 %v214
    %248 = vmatprep.subr.mxu0 %v217
    %249 = vmatpush1.xpose.msra.mxu0 %v216
    %250 = vmatprep.subr.mxu0 %v219
    %251 = vmatpush1.xpose.msra.mxu0 %v218
    %252 = vmatprep.subr.mxu0 %v221
    %253 = vmatpush1.xpose.msra.mxu0 %v220
    %254 = vmatprep.subr.mxu0 %v223
    %255 = vmatpush1.xpose.msra.mxu0 %v222
    %256 = vmatprep.subr.mxu0 %v225
    %257 = vmatpush1.xpose.msra.mxu0 %v224
    %258 = vmatprep.subr.mxu0 %v227
    %259 = vmatpush1.xpose.msra.mxu0 %v226
    %260 = vmatprep.subr.mxu0 %v229
    %261 = vmatpush1.xpose.msra.mxu0 %v228
    %262 = vmatprep.subr.mxu0 0.0
    %263 = vmatpush1.xpose.msra.mxu0 0.0
    %264 = vmatprep.subr.mxu0 0.0
    %265 = vmatpush1.xpose.msra.mxu0 0.0
    %266 = vmatprep.subr.mxu0 0.0
    %267 = vmatpush1.xpose.msra.mxu0 0.0
    %268 = vmatprep.subr.mxu0 0.0
    %269 = vmatpush1.xpose.msra.mxu0 0.0
    %270 = vmatprep.subr.mxu0 0.0
    %271 = vmatpush1.xpose.msra.mxu0 0.0
    %272 = vmatprep.subr.mxu0 0.0
    %273 = vmatpush1.xpose.msra.mxu0 0.0
    %274 = vmatprep.subr.mxu0 0.0
    %275 = vmatpush1.xpose.msra.mxu0 0.0
    %276 = vmatprep.subr.mxu0 0.0
    %277 = vmatpush1.xpose.msra.mxu0 0.0
    %278 = vmatprep.subr.mxu0 0.0
    %279 = vmatpush1.xpose.msra.mxu0 0.0
    %280 = vmatprep.subr.mxu0 0.0
    %281 = vmatpush1.xpose.msra.mxu0 0.0
    %282 = vmatprep.subr.mxu0 0.0
    %283 = vmatpush1.xpose.msra.mxu0 0.0
    %284 = vmatprep.subr.mxu0 0.0
    %285 = vmatpush1.xpose.msra.mxu0 0.0
    %286 = vmatprep.subr.mxu0 0.0
    %287 = vmatpush1.xpose.msra.mxu0 0.0
    %288 = vmatprep.subr.mxu0 0.0
    %289 = vmatpush1.xpose.msra.mxu0 0.0
    %290 = vmatprep.subr.mxu0 0.0
    %291 = vmatpush1.xpose.msra.mxu0 0.0
    %292 = vmatprep.subr.mxu0 0.0
    %293 = vmatpush1.xpose.msra.mxu0 0.0
    %294 = vmatprep.mubr.f32.mxu0 %v46
    %295 = vmatmul.mubr.f32.gmra.mrb[0].mxu0 %v45
    %v296 = vpop.f32.mrb[0].mxu0
    %v297 = vadd.f32 0.0, %v296
    %v298 = vpop.f32.mrb[0].mxu0
    %299 = vdwg.mxu0
    %v300 = vmul.f32 %v297, %v85
    %301 = vst [vmem:[#allocation7] sm:$0xff] %v300
    %v302 = vlaneseq
    %v303 = vand.u32 %v302, 127
    %vm304 = vcmp.lt.s32.totalorder %v303, 8
    %v305 = vsel %vm304, %v300, -1e+30
    %306 = vmax.xlane.f32.xlu0 %v305
    %v307 = vpop.xlane.xlu0 %306
    %vm308 = vcmp.ge.f32.partialorder %v305, %v307
    %v309 = vsel %vm308, %v303, 128
    %v310 = vand.u32 %v309, 65535
    %v311 = vshra.s32 %v309, 16
    %v312 = vcvt.s32.f32 %v310
    %v313 = vcvt.s32.f32 %v311
    %314 = vmin.xlane.f32.xlu0 %v313
    %v315 = vpop.xlane.xlu0 %314
    %vm316 = vcmp.eq.f32.partialorder %v313, %v315
    %v317 = vsel %vm316, %v312, inf
    %318 = vmin.xlane.f32.xlu0 %v317
    %v319 = vpop.xlane.xlu0 %318
    %v320 = vcvt.f32.s32 %v319
    %v321 = vcvt.f32.s32 %v315
    %v322 = vshll.u32 %v321, 16
    %v323 = vadd.s32 %v322, %v320
    %vm324 = vcmask 7168
    %325 = vst.msk [vmem:[%s3] sm:$0xff] %vm324, %v323
    %vm326 = vcmp.eq.s32.totalorder %v303, %v323
    %v327 = vsel %vm326, 1, 0
    %v328 = vcvt.s32.f32 %v327
    %329 = vmatprep.subr.mxu0 %v48
    %330 = vmatpush1.msra.mxu0 %v47
    %331 = vmatprep.subr.mxu0 %v50
    %332 = vmatpush1.msra.mxu0 %v49
    %333 = vmatprep.subr.mxu0 %v52
    %334 = vmatpush1.msra.mxu0 %v51
    %335 = vmatprep.subr.mxu0 %v54
    %336 = vmatpush1.msra.mxu0 %v53
    %337 = vmatprep.subr.mxu0 %v56
    %338 = vmatpush1.msra.mxu0 %v55
    %339 = vmatprep.subr.mxu0 %v58
    %340 = vmatpush1.msra.mxu0 %v57
    %341 = vmatprep.subr.mxu0 %v60
    %342 = vmatpush1.msra.mxu0 %v59
    %343 = vmatprep.subr.mxu0 %v62
    %344 = vmatpush1.msra.mxu0 %v61
    %345 = vmatprep.subr.mxu0 %v64
    %346 = vmatpush1.msra.mxu0 %v63
    %347 = vmatprep.subr.mxu0 %v66
    %348 = vmatpush1.msra.mxu0 %v65
    %349 = vmatprep.subr.mxu0 %v68
    %350 = vmatpush1.msra.mxu0 %v67
    %351 = vmatprep.subr.mxu0 %v70
    %352 = vmatpush1.msra.mxu0 %v69
    %353 = vmatprep.subr.mxu0 %v72
    %354 = vmatpush1.msra.mxu0 %v71
    %355 = vmatprep.subr.mxu0 %v74
    %356 = vmatpush1.msra.mxu0 %v73
    %357 = vmatprep.subr.mxu0 %v76
    %358 = vmatpush1.msra.mxu0 %v75
    %359 = vmatprep.subr.mxu0 %v78
    %360 = vmatpush1.msra.mxu0 %v77
    %361 = vmatprep.subr.mxu0 0.0
    %362 = vmatpush1.msra.mxu0 0.0
    %363 = vmatprep.subr.mxu0 0.0
    %364 = vmatpush1.msra.mxu0 0.0
    %365 = vmatprep.subr.mxu0 0.0
    %366 = vmatpush1.msra.mxu0 0.0
    %367 = vmatprep.subr.mxu0 0.0
    %368 = vmatpush1.msra.mxu0 0.0
    %369 = vmatprep.subr.mxu0 0.0
    %370 = vmatpush1.msra.mxu0 0.0
    %371 = vmatprep.subr.mxu0 0.0
    %372 = vmatpush1.msra.mxu0 0.0
    %373 = vmatprep.subr.mxu0 0.0
    %374 = vmatpush1.msra.mxu0 0.0
    %375 = vmatprep.subr.mxu0 0.0
    %376 = vmatpush1.msra.mxu0 0.0
    %377 = vmatprep.subr.mxu0 0.0
    %378 = vmatpush1.msra.mxu0 0.0
    %379 = vmatprep.subr.mxu0 0.0
    %380 = vmatpush1.msra.mxu0 0.0
    %381 = vmatprep.subr.mxu0 0.0
    %382 = vmatpush1.msra.mxu0 0.0
    %383 = vmatprep.subr.mxu0 0.0
    %384 = vmatpush1.msra.mxu0 0.0
    %385 = vmatprep.subr.mxu0 0.0
    %386 = vmatpush1.msra.mxu0 0.0
    %387 = vmatprep.subr.mxu0 0.0
    %388 = vmatpush1.msra.mxu0 0.0
    %389 = vmatprep.subr.mxu0 0.0
    %390 = vmatpush1.msra.mxu0 0.0
    %391 = vmatprep.subr.mxu0 0.0
    %392 = vmatpush1.msra.mxu0 0.0
    %393 = vmatprep.mubr.f32.mxu0 0.0
    %394 = vmatmul.mubr.f32.gmra.mrb[0].mxu0 %v328
    %v395 = vpop.f32.mrb[0].mxu0
    %v396 = vadd.f32 0.0, %v395
    %v397 = vpop.f32.mrb[0].mxu0
    %v398 = vadd.f32 0.0, %v397
    %399 = vdwg.mxu0
    %400 = vst [vmem:[#allocation8] sm:$0xff] %v396
    %401 = vst [vmem:[#allocation8 + $0x8] sm:$0xff] %v398
    %402 = vxpose.xlu0.b32.start [1/16] %v328, 128
    %403 = vxpose.xlu0.b32.cont [2/16] 0.0, 128
    %404 = vxpose.xlu0.b32.cont [3/16] 0.0, 128
    %405 = vxpose.xlu0.b32.cont [4/16] 0.0, 128
    %406 = vxpose.xlu0.b32.cont [5/16] 0.0, 128
    %407 = vxpose.xlu0.b32.cont [6/16] 0.0, 128
    %408 = vxpose.xlu0.b32.cont [7/16] 0.0, 128
    %409 = vxpose.xlu0.b32.cont [8/16] 0.0, 128
    %410 = vxpose.xlu0.b32.cont [9/16] 0.0, 128
    %411 = vxpose.xlu0.b32.cont [10/16] 0.0, 128
    %412 = vxpose.xlu0.b32.cont [11/16] 0.0, 128
    %413 = vxpose.xlu0.b32.cont [12/16] 0.0, 128
    %414 = vxpose.xlu0.b32.cont [13/16] 0.0, 128
    %415 = vxpose.xlu0.b32.cont [14/16] 0.0, 128
    %416 = vxpose.xlu0.b32.cont [15/16] 0.0, 128
    %417 = vxpose.xlu0.b32.end [16/16] 0.0, 128
    %v418 = vpop.trf.xlu0
    %v419 = vpop.trf.xlu0
    %v420 = vpop.trf.xlu0
    %v421 = vpop.trf.xlu0
    %v422 = vpop.trf.xlu0
    %v423 = vpop.trf.xlu0
    %v424 = vpop.trf.xlu0
    %v425 = vpop.trf.xlu0
    %v426 = vpop.trf.xlu0
    %v427 = vpop.trf.xlu0
    %v428 = vpop.trf.xlu0
    %v429 = vpop.trf.xlu0
    %v430 = vpop.trf.xlu0
    %v431 = vpop.trf.xlu0
    %v432 = vpop.trf.xlu0
    %v433 = vpop.trf.xlu0
    %vm434 = vcmask 64512
    %v436 = vsel %vm434, %v418, 0
    %v439 = vsel %vm434, %v419, 0
    %v442 = vsel %vm434, %v420, 0
    %v445 = vsel %vm434, %v421, 0
    %v448 = vsel %vm434, %v422, 0
    %v451 = vsel %vm434, %v423, 0
    %v454 = vsel %vm434, %v424, 0
    %v457 = vsel %vm434, %v425, 0
    %v460 = vsel %vm434, %v426, 0
    %v463 = vsel %vm434, %v427, 0
    %v466 = vsel %vm434, %v428, 0
    %v469 = vsel %vm434, %v429, 0
    %v472 = vsel %vm434, %v430, 0
    %v475 = vsel %vm434, %v431, 0
    %v478 = vsel %vm434, %v432, 0
    %v481 = vsel %vm434, %v433, 0
    %483 = vmatprep.subr.mxu0 %v46
    %484 = vmatpush1.msra.mxu0 %v45
    %485 = vmatprep.subr.mxu0 0.0
    %486 = vmatpush1.msra.mxu0 0.0
    %487 = vmatprep.subr.mxu0 0.0
    %488 = vmatpush1.msra.mxu0 0.0
    %489 = vmatprep.subr.mxu0 0.0
    %490 = vmatpush1.msra.mxu0 0.0
    %491 = vmatprep.subr.mxu0 0.0
    %492 = vmatpush1.msra.mxu0 0.0
    %493 = vmatprep.subr.mxu0 0.0
    %494 = vmatpush1.msra.mxu0 0.0
    %495 = vmatprep.subr.mxu0 0.0
    %496 = vmatpush1.msra.mxu0 0.0
    %497 = vmatprep.subr.mxu0 0.0
    %498 = vmatpush1.msra.mxu0 0.0
    %499 = vmatprep.subr.mxu0 0.0
    %500 = vmatpush1.msra.mxu0 0.0
    %501 = vmatprep.subr.mxu0 0.0
    %502 = vmatpush1.msra.mxu0 0.0
    %503 = vmatprep.subr.mxu0 0.0
    %504 = vmatpush1.msra.mxu0 0.0
    %505 = vmatprep.subr.mxu0 0.0
    %506 = vmatpush1.msra.mxu0 0.0
    %507 = vmatprep.subr.mxu0 0.0
    %508 = vmatpush1.msra.mxu0 0.0
    %509 = vmatprep.subr.mxu0 0.0
    %510 = vmatpush1.msra.mxu0 0.0
    %511 = vmatprep.subr.mxu0 0.0
    %512 = vmatpush1.msra.mxu0 0.0
    %513 = vmatprep.subr.mxu0 0.0
    %514 = vmatpush1.msra.mxu0 0.0
    %515 = vmatprep.subr.mxu0 0.0
    %516 = vmatpush1.msra.mxu0 0.0
    %517 = vmatprep.subr.mxu0 0.0
    %518 = vmatpush1.msra.mxu0 0.0
    %519 = vmatprep.subr.mxu0 0.0
    %520 = vmatpush1.msra.mxu0 0.0
    %521 = vmatprep.subr.mxu0 0.0
    %522 = vmatpush1.msra.mxu0 0.0
    %523 = vmatprep.subr.mxu0 0.0
    %524 = vmatpush1.msra.mxu0 0.0
    %525 = vmatprep.subr.mxu0 0.0
    %526 = vmatpush1.msra.mxu0 0.0
    %527 = vmatprep.subr.mxu0 0.0
    %528 = vmatpush1.msra.mxu0 0.0
    %529 = vmatprep.subr.mxu0 0.0
    %530 = vmatpush1.msra.mxu0 0.0
    %531 = vmatprep.subr.mxu0 0.0
    %532 = vmatpush1.msra.mxu0 0.0
    %533 = vmatprep.subr.mxu0 0.0
    %534 = vmatpush1.msra.mxu0 0.0
    %535 = vmatprep.subr.mxu0 0.0
    %536 = vmatpush1.msra.mxu0 0.0
    %537 = vmatprep.subr.mxu0 0.0
    %538 = vmatpush1.msra.mxu0 0.0
    %539 = vmatprep.subr.mxu0 0.0
    %540 = vmatpush1.msra.mxu0 0.0
    %541 = vmatprep.subr.mxu0 0.0
    %542 = vmatpush1.msra.mxu0 0.0
    %543 = vmatprep.subr.mxu0 0.0
    %544 = vmatpush1.msra.mxu0 0.0
    %545 = vmatprep.subr.mxu0 0.0
    %546 = vmatpush1.msra.mxu0 0.0
    %547 = vmatprep.mubr.f32.mxu0 0.0
    %548 = vmatmul.mubr.f32.gmra.mrb[0].mxu0 %v436
    %v549 = vpop.f32.mrb[0].mxu0
    %v550 = vadd.f32 0.0, %v549
    %v551 = vpop.f32.mrb[0].mxu0
    %v552 = vadd.f32 0.0, %v551
    %553 = vmatprep.mubr.f32.mxu0 0.0
    %554 = vmatmul.mubr.f32.gmra.mrb[0].mxu0 %v439
    %v555 = vpop.f32.mrb[0].mxu0
    %v556 = vadd.f32 0.0, %v555
    %v557 = vpop.f32.mrb[0].mxu0
    %v558 = vadd.f32 0.0, %v557
    %559 = vmatprep.mubr.f32.mxu0 0.0
    %560 = vmatmul.mubr.f32.gmra.mrb[0].mxu0 %v442
    %v561 = vpop.f32.mrb[0].mxu0
    %v562 = vadd.f32 0.0, %v561
    %v563 = vpop.f32.mrb[0].mxu0
    %v564 = vadd.f32 0.0, %v563
    %565 = vmatprep.mubr.f32.mxu0 0.0
    %566 = vmatmul.mubr.f32.gmra.mrb[0].mxu0 %v445
    %v567 = vpop.f32.mrb[0].mxu0
    %v568 = vadd.f32 0.0, %v567
    %v569 = vpop.f32.mrb[0].mxu0
    %v570 = vadd.f32 0.0, %v569
    %571 = vmatprep.mubr.f32.mxu0 0.0
    %572 = vmatmul.mubr.f32.gmra.mrb[0].mxu0 %v448
    %v573 = vpop.f32.mrb[0].mxu0
    %v574 = vadd.f32 0.0, %v573
    %v575 = vpop.f32.mrb[0].mxu0
    %v576 = vadd.f32 0.0, %v575
    %577 = vmatprep.mubr.f32.mxu0 0.0
    %578 = vmatmul.mubr.f32.gmra.mrb[0].mxu0 %v451
    %v579 = vpop.f32.mrb[0].mxu0
    %v580 = vadd.f32 0.0, %v579
    %v581 = vpop.f32.mrb[0].mxu0
    %v582 = vadd.f32 0.0, %v581
    %583 = vmatprep.mubr.f32.mxu0 0.0
    %584 = vmatmul.mubr.f32.gmra.mrb[0].mxu0 %v454
    %v585 = vpop.f32.mrb[0].mxu0
    %v586 = vadd.f32 0.0, %v585
    %v587 = vpop.f32.mrb[0].mxu0
    %v588 = vadd.f32 0.0, %v587
    %589 = vmatprep.mubr.f32.mxu0 0.0
    %590 = vmatmul.mubr.f32.gmra.mrb[0].mxu0 %v457
    %v591 = vpop.f32.mrb[0].mxu0
    %v592 = vadd.f32 0.0, %v591
    %v593 = vpop.f32.mrb[0].mxu0
    %v594 = vadd.f32 0.0, %v593
    %595 = vmatprep.mubr.f32.mxu0 0.0
    %596 = vmatmul.mubr.f32.gmra.mrb[0].mxu0 %v460
    %v597 = vpop.f32.mrb[0].mxu0
    %v598 = vadd.f32 0.0, %v597
    %v599 = vpop.f32.mrb[0].mxu0
    %v600 = vadd.f32 0.0, %v599
    %601 = vmatprep.mubr.f32.mxu0 0.0
    %602 = vmatmul.mubr.f32.gmra.mrb[0].mxu0 %v463
    %v603 = vpop.f32.mrb[0].mxu0
    %v604 = vadd.f32 0.0, %v603
    %v605 = vpop.f32.mrb[0].mxu0
    %v606 = vadd.f32 0.0, %v605
    %607 = vmatprep.mubr.f32.mxu0 0.0
    %608 = vmatmul.mubr.f32.gmra.mrb[0].mxu0 %v466
    %v609 = vpop.f32.mrb[0].mxu0
    %v610 = vadd.f32 0.0, %v609
    %v611 = vpop.f32.mrb[0].mxu0
    %v612 = vadd.f32 0.0, %v611
    %613 = vmatprep.mubr.f32.mxu0 0.0
    %614 = vmatmul.mubr.f32.gmra.mrb[0].mxu0 %v469
    %v615 = vpop.f32.mrb[0].mxu0
    %v616 = vadd.f32 0.0, %v615
    %v617 = vpop.f32.mrb[0].mxu0
    %v618 = vadd.f32 0.0, %v617
    %619 = vmatprep.mubr.f32.mxu0 0.0
    %620 = vmatmul.mubr.f32.gmra.mrb[0].mxu0 %v472
    %v621 = vpop.f32.mrb[0].mxu0
    %v622 = vadd.f32 0.0, %v621
    %v623 = vpop.f32.mrb[0].mxu0
    %v624 = vadd.f32 0.0, %v623
    %625 = vmatprep.mubr.f32.mxu0 0.0
    %626 = vmatmul.mubr.f32.gmra.mrb[0].mxu0 %v475
    %v627 = vpop.f32.mrb[0].mxu0
    %v628 = vadd.f32 0.0, %v627
    %v629 = vpop.f32.mrb[0].mxu0
    %v630 = vadd.f32 0.0, %v629
    %631 = vmatprep.mubr.f32.mxu0 0.0
    %632 = vmatmul.mubr.f32.gmra.mrb[0].mxu0 %v478
    %v633 = vpop.f32.mrb[0].mxu0
    %v634 = vadd.f32 0.0, %v633
    %v635 = vpop.f32.mrb[0].mxu0
    %v636 = vadd.f32 0.0, %v635
    %637 = vmatprep.mubr.f32.mxu0 0.0
    %638 = vmatmul.mubr.f32.gmra.mrb[0].mxu0 %v481
    %v639 = vpop.f32.mrb[0].mxu0
    %v640 = vadd.f32 0.0, %v639
    %v641 = vpop.f32.mrb[0].mxu0
    %v642 = vadd.f32 0.0, %v641
    %643 = vdwg.mxu0
    %644 = vst [vmem:[#allocation10] sm:$0xff] %v550
    %645 = vst [vmem:[#allocation10 + $0x8] sm:$0xff] %v552
    %646 = vst [vmem:[#allocation10 + $0x10] sm:$0xff] %v556
    %647 = vst [vmem:[#allocation10 + $0x18] sm:$0xff] %v558
    %648 = vst [vmem:[#allocation10 + $0x20] sm:$0xff] %v562
    %649 = vst [vmem:[#allocation10 + $0x28] sm:$0xff] %v564
    %650 = vst [vmem:[#allocation10 + $0x30] sm:$0xff] %v568
    %651 = vst [vmem:[#allocation10 + $0x38] sm:$0xff] %v570
    %652 = vst [vmem:[#allocation10 + $0x40] sm:$0xff] %v574
    %653 = vst [vmem:[#allocation10 + $0x48] sm:$0xff] %v576
    %654 = vst [vmem:[#allocation10 + $0x50] sm:$0xff] %v580
    %655 = vst [vmem:[#allocation10 + $0x58] sm:$0xff] %v582
    %656 = vst [vmem:[#allocation10 + $0x60] sm:$0xff] %v586
    %657 = vst [vmem:[#allocation10 + $0x68] sm:$0xff] %v588
    %658 = vst [vmem:[#allocation10 + $0x70] sm:$0xff] %v592
    %659 = vst [vmem:[#allocation10 + $0x78] sm:$0xff] %v594
    %660 = vst [vmem:[#allocation10 + $0x80] sm:$0xff] %v598
    %661 = vst [vmem:[#allocation10 + $0x88] sm:$0xff] %v600
    %662 = vst [vmem:[#allocation10 + $0x90] sm:$0xff] %v604
    %663 = vst [vmem:[#allocation10 + $0x98] sm:$0xff] %v606
    %664 = vst [vmem:[#allocation10 + $0xa0] sm:$0xff] %v610
    %665 = vst [vmem:[#allocation10 + $0xa8] sm:$0xff] %v612
    %666 = vst [vmem:[#allocation10 + $0xb0] sm:$0xff] %v616
    %667 = vst [vmem:[#allocation10 + $0xb8] sm:$0xff] %v618
    %668 = vst [vmem:[#allocation10 + $0xc0] sm:$0xff] %v622
    %669 = vst [vmem:[#allocation10 + $0xc8] sm:$0xff] %v624
    %670 = vst [vmem:[#allocation10 + $0xd0] sm:$0xff] %v628
    %671 = vst [vmem:[#allocation10 + $0xd8] sm:$0xff] %v630
    %672 = vst [vmem:[#allocation10 + $0xe0] sm:$0xff] %v634
    %673 = vst [vmem:[#allocation10 + $0xe8] sm:$0xff] %v636
    %674 = vst [vmem:[#allocation10 + $0xf0] sm:$0xff] %v640
    %675 = vst [vmem:[#allocation10 + $0xf8] sm:$0xff] %v642
    %676 = vxpose.xlu0.b32.start [1/16] 1.0, 128
    %677 = vxpose.xlu0.b32.cont [2/16] 0.0, 128
    %678 = vxpose.xlu0.b32.cont [3/16] 0.0, 128
    %679 = vxpose.xlu0.b32.cont [4/16] 0.0, 128
    %680 = vxpose.xlu0.b32.cont [5/16] 0.0, 128
    %681 = vxpose.xlu0.b32.cont [6/16] 0.0, 128
    %682 = vxpose.xlu0.b32.cont [7/16] 0.0, 128
    %683 = vxpose.xlu0.b32.cont [8/16] 0.0, 128
    %684 = vxpose.xlu0.b32.cont [9/16] 0.0, 128
    %685 = vxpose.xlu0.b32.cont [10/16] 0.0, 128
    %686 = vxpose.xlu0.b32.cont [11/16] 0.0, 128
    %687 = vxpose.xlu0.b32.cont [12/16] 0.0, 128
    %688 = vxpose.xlu0.b32.cont [13/16] 0.0, 128
    %689 = vxpose.xlu0.b32.cont [14/16] 0.0, 128
    %690 = vxpose.xlu0.b32.cont [15/16] 0.0, 128
    %691 = vxpose.xlu0.b32.end [16/16] 0.0, 128
    %v692 = vpop.trf.xlu0
    %v693 = vpop.trf.xlu0
    %v694 = vpop.trf.xlu0
    %v695 = vpop.trf.xlu0
    %v696 = vpop.trf.xlu0
    %v697 = vpop.trf.xlu0
    %v698 = vpop.trf.xlu0
    %v699 = vpop.trf.xlu0
    %v700 = vpop.trf.xlu0
    %v701 = vpop.trf.xlu0
    %v702 = vpop.trf.xlu0
    %v703 = vpop.trf.xlu0
    %v704 = vpop.trf.xlu0
    %v705 = vpop.trf.xlu0
    %v706 = vpop.trf.xlu0
    %v707 = vpop.trf.xlu0
    %v709 = vsel %vm434, %v692, 0
    %711 = vmatprep.subr.mxu0 0.0
    %712 = vmatpush1.msra.mxu0 %v328
    %713 = vmatprep.subr.mxu0 0.0
    %714 = vmatpush1.msra.mxu0 0.0
    %715 = vmatprep.subr.mxu0 0.0
    %716 = vmatpush1.msra.mxu0 0.0
    %717 = vmatprep.subr.mxu0 0.0
    %718 = vmatpush1.msra.mxu0 0.0
    %719 = vmatprep.subr.mxu0 0.0
    %720 = vmatpush1.msra.mxu0 0.0
    %721 = vmatprep.subr.mxu0 0.0
    %722 = vmatpush1.msra.mxu0 0.0
    %723 = vmatprep.subr.mxu0 0.0
    %724 = vmatpush1.msra.mxu0 0.0
    %725 = vmatprep.subr.mxu0 0.0
    %726 = vmatpush1.msra.mxu0 0.0
    %727 = vmatprep.subr.mxu0 0.0
    %728 = vmatpush1.msra.mxu0 0.0
    %729 = vmatprep.subr.mxu0 0.0
    %730 = vmatpush1.msra.mxu0 0.0
    %731 = vmatprep.subr.mxu0 0.0
    %732 = vmatpush1.msra.mxu0 0.0
    %733 = vmatprep.subr.mxu0 0.0
    %734 = vmatpush1.msra.mxu0 0.0
    %735 = vmatprep.subr.mxu0 0.0
    %736 = vmatpush1.msra.mxu0 0.0
    %737 = vmatprep.subr.mxu0 0.0
    %738 = vmatpush1.msra.mxu0 0.0
    %739 = vmatprep.subr.mxu0 0.0
    %740 = vmatpush1.msra.mxu0 0.0
    %741 = vmatprep.subr.mxu0 0.0
    %742 = vmatpush1.msra.mxu0 0.0
    %743 = vmatprep.subr.mxu0 0.0
    %744 = vmatpush1.msra.mxu0 0.0
    %745 = vmatprep.subr.mxu0 0.0
    %746 = vmatpush1.msra.mxu0 0.0
    %747 = vmatprep.subr.mxu0 0.0
    %748 = vmatpush1.msra.mxu0 0.0
    %749 = vmatprep.subr.mxu0 0.0
    %750 = vmatpush1.msra.mxu0 0.0
    %751 = vmatprep.subr.mxu0 0.0
    %752 = vmatpush1.msra.mxu0 0.0
    %753 = vmatprep.subr.mxu0 0.0
    %754 = vmatpush1.msra.mxu0 0.0
    %755 = vmatprep.subr.mxu0 0.0
    %756 = vmatpush1.msra.mxu0 0.0
    %757 = vmatprep.subr.mxu0 0.0
    %758 = vmatpush1.msra.mxu0 0.0
    %759 = vmatprep.subr.mxu0 0.0
    %760 = vmatpush1.msra.mxu0 0.0
    %761 = vmatprep.subr.mxu0 0.0
    %762 = vmatpush1.msra.mxu0 0.0
    %763 = vmatprep.subr.mxu0 0.0
    %764 = vmatpush1.msra.mxu0 0.0
    %765 = vmatprep.subr.mxu0 0.0
    %766 = vmatpush1.msra.mxu0 0.0
    %767 = vmatprep.subr.mxu0 0.0
    %768 = vmatpush1.msra.mxu0 0.0
    %769 = vmatprep.subr.mxu0 0.0
    %770 = vmatpush1.msra.mxu0 0.0
    %771 = vmatprep.subr.mxu0 0.0
    %772 = vmatpush1.msra.mxu0 0.0
    %773 = vmatprep.subr.mxu0 0.0
    %774 = vmatpush1.msra.mxu0 0.0
    %775 = vmatprep.mubr.f32.mxu0 0.0
    %776 = vmatmul.mubr.f32.gmra.mrb[0].mxu0 %v709
    %v777 = vpop.f32.mrb[0].mxu0
    %v778 = vadd.f32 0.0, %v777
    %v779 = vpop.f32.mrb[0].mxu0
    %780 = vdwg.mxu0
    %781 = vst [vmem:[#allocation11] sm:$0x1] %v778
    // Predicated region
    $region18: #{tpu_custom_call.1} parent=1 // pred_check
      _
    $region19: #{tpu_custom_call.1} parent=1 // pred_check_branch
      %783 = sbr.rel (0) target = $region21
    $region20: #{tpu_custom_call.1} parent=1 // pred_region
      %s785 = ssub.s32 128, 128
      %786 = vsyncadd [#allocation4], %s785
      %s788 = sshll.u32 [#allocation7], 4
      %s789 = int_to_ptr.vmem [resolvable:$true] %s788
      %791 = dma.vmem_to_hbm [thread:$0]  %s789, 128, %s2, [#allocation4]
    $region21: #{tpu_custom_call.1} parent=1 // pred_fallthru
      _
    // Predicated region
    $region22: #{tpu_custom_call.1} parent=1 // pred_check
      _
    $region23: #{tpu_custom_call.1} parent=1 // pred_check_branch
      %793 = sbr.rel (0) target = $region25
    $region24: #{tpu_custom_call.1} parent=1 // pred_region
      _
    $region25: #{tpu_custom_call.1} parent=1 // pred_fallthru
      _
    // Predicated region
    $region26: #{tpu_custom_call.1} parent=1 // pred_check
      _
    $region27: #{tpu_custom_call.1} parent=1 // pred_check_branch
      %795 = sbr.rel (0) target = $region29
    $region28: #{tpu_custom_call.1} parent=1 // pred_region
      %s797 = ssub.s32 256, 256
      %798 = vsyncadd [#allocation9], %s797
      %s800 = sshll.u32 [#allocation8], 4
      %s801 = int_to_ptr.vmem [resolvable:$true] %s800
      %803 = dma.vmem_to_hbm [thread:$0]  %s801, 256, %s4, [#allocation9]
    $region29: #{tpu_custom_call.1} parent=1 // pred_fallthru
      _
    // Predicated region
    $region30: #{tpu_custom_call.1} parent=1 // pred_check
      _
    $region31: #{tpu_custom_call.1} parent=1 // pred_check_branch
      %805 = sbr.rel (0) target = $region33
    $region32: #{tpu_custom_call.1} parent=1 // pred_region
      %s807 = ssub.s32 4096, 4096
      %808 = vsyncadd [#allocation9], %s807
      %s809 = sshll.u32 [#allocation10], 4
      %s810 = int_to_ptr.vmem [resolvable:$true] %s809
      %815 = dma.vmem_to_hbm [thread:$0]  %s810, 4096, %s5, [#allocation9], 256, 256, 16
    $region33: #{tpu_custom_call.1} parent=1 // pred_fallthru
      _
    // Predicated region
    $region34: #{tpu_custom_call.1} parent=1 // pred_check
      _
    $region35: #{tpu_custom_call.1} parent=1 // pred_check_branch
      %817 = sbr.rel (0) target = $region37
    $region36: #{tpu_custom_call.1} parent=1 // pred_region
      %s819 = ssub.s32 16, 16
      %820 = vsyncadd [#allocation12], %s819
      %s822 = sshll.u32 [#allocation11], 4
      %s823 = int_to_ptr.vmem [resolvable:$true] %s822
      %825 = dma.vmem_to_hbm [thread:$0]  %s823, 16, %s6, [#allocation12]
    $region37: #{tpu_custom_call.1} parent=1 // pred_fallthru
      _
    // Predicated region
    $region38: #{tpu_custom_call.1} parent=1 // pred_check
      _
    $region39: #{tpu_custom_call.1} parent=1 // pred_check_branch
      %827 = sbr.rel (0) target = $region41
    $region40: #{tpu_custom_call.1} parent=1 // pred_region
      %828 = dma.done [#allocation4], 128
    $region41: #{tpu_custom_call.1} parent=1 // pred_fallthru
      _
    // Predicated region
    $region42: #{tpu_custom_call.1} parent=1 // pred_check
      _
    $region43: #{tpu_custom_call.1} parent=1 // pred_check_branch
      %830 = sbr.rel (0) target = $region45
    $region44: #{tpu_custom_call.1} parent=1 // pred_region
      _
    $region45: #{tpu_custom_call.1} parent=1 // pred_fallthru
      _
    // Predicated region
    $region46: #{tpu_custom_call.1} parent=1 // pred_check
      _
    $region47: #{tpu_custom_call.1} parent=1 // pred_check_branch
      %832 = sbr.rel (0) target = $region49
    $region48: #{tpu_custom_call.1} parent=1 // pred_region
      %833 = dma.done [#allocation9], 256
    $region49: #{tpu_custom_call.1} parent=1 // pred_fallthru
      _
    // Predicated region
    $region50: #{tpu_custom_call.1} parent=1 // pred_check
      _
    $region51: #{tpu_custom_call.1} parent=1 // pred_check_branch
      %835 = sbr.rel (0) target = $region53
    $region52: #{tpu_custom_call.1} parent=1 // pred_region
      %836 = dma.done [#allocation9], 4096
    $region53: #{tpu_custom_call.1} parent=1 // pred_fallthru
      _
    // Predicated region
    $region54: #{tpu_custom_call.1} parent=1 // pred_check
      _
    $region55: #{tpu_custom_call.1} parent=1 // pred_check_branch
      %838 = sbr.rel (0) target = $region57
    $region56: #{tpu_custom_call.1} parent=1 // pred_region
      %839 = dma.done [#allocation12], 16
    $region57: #{tpu_custom_call.1} parent=1 // pred_fallthru
      _
    %840 = vsyncpa [#allocation3], 1
    %841 = vsyncpa [#allocation6], 1
    %842 = vsyncpa [#allocation4], 1
    %843 = vsyncpa [#allocation9], 1
    %844 = vsyncpa [#allocation12], 1

</llo_original>
